<compile_context>
chip_gen: v7x
topology: tpu7x:2x2x1
jax: 0.10.0
libtpu: 0.0.40
codegen_flags: <defaults>
</compile_context>

<pallas_src>
import jax
import jax.numpy as jnp
from jax.experimental import pallas as pl
from jax.experimental.pallas import tpu as pltpu


def _soft_unit_embed_kernel(x_ref, w_ref, o_ref):
    """o = x @ w for one M-tile; K and N are whole, weight resident in VMEM."""
    o_ref[...] = jnp.dot(
        x_ref[...], w_ref[...], preferred_element_type=jnp.float32
    ).astype(o_ref.dtype)


def soft_unit_embedding(
    soft_units,
    embedding_matrix,
    *,
    tm=512,
    compute_dtype=None,
    vmem_limit_bytes=32 * 1024 * 1024,
):
    """soft_units: [B, S, K]; embedding_matrix: [K, N] -> [B, S, N]."""
    B, S, K = soft_units.shape
    K2, N = embedding_matrix.shape
    assert K == K2, f"soft_unit_dim mismatch: {K} vs {K2}"

    out_dtype = soft_units.dtype
    M = B * S
    x = soft_units.reshape(M, K)
    w = embedding_matrix

    if compute_dtype is not None:
        x = x.astype(compute_dtype)
        w = w.astype(compute_dtype)

    # Tile only the M axis.  Small M -> single full-extent block (no padding,
    # no divisibility constraint).  Large M -> tm-sized tiles (tm multiple of 8),
    # zero-pad rows up to a multiple of tm and slice the result back.
    if M <= tm:
        tm_eff = M
        m_pad = M
    else:
        assert tm % 16 == 0, "tm must be a multiple of 16 (covers f32/bf16 sublanes)"
        tm_eff = tm
        m_pad = pl.cdiv(M, tm_eff) * tm_eff
        if m_pad != M:
            x = jnp.pad(x, ((0, m_pad - M), (0, 0)))

    grid = (m_pad // tm_eff,)

    itemsize = lambda d: jnp.dtype(d).itemsize
    cost = pl.CostEstimate(
        flops=2 * M * K * N,
        transcendentals=0,
        bytes_accessed=(
            itemsize(x.dtype) * M * K
            + itemsize(w.dtype) * K * N
            + itemsize(out_dtype) * M * N
        ),
    )

    out = pl.pallas_call(
        _soft_unit_embed_kernel,
        out_shape=jax.ShapeDtypeStruct((m_pad, N), out_dtype),
        grid_spec=pltpu.PrefetchScalarGridSpec(
            num_scalar_prefetch=0,
            grid=grid,
            in_specs=[
                # M-tile of activations: (tm_eff, K) — K whole (full-dim block).
                pl.BlockSpec((tm_eff, K), lambda i: (i, 0)),
                # Whole embedding matrix, constant block index -> resident in VMEM.
                pl.BlockSpec((K, N), lambda i: (0, 0)),
            ],
            out_specs=pl.BlockSpec((tm_eff, N), lambda i: (i, 0)),
        ),
        compiler_params=pltpu.CompilerParams(
            dimension_semantics=("parallel",),
            vmem_limit_bytes=vmem_limit_bytes,
        ),
        cost_estimate=cost,
    )(x, w)

    if m_pad != M:
        out = out[:M]
    return out.reshape(B, S, N)


class SoftUnitEmbeddingPallas:
    """Mirrors the PyTorch module: randn(soft_unit_dim, embedding_dim) * 0.1."""

    def __init__(self, soft_unit_dim=1000, embedding_dim=256, key=None,
                 compute_dtype=None):
        self.soft_unit_dim = soft_unit_dim
        self.embedding_dim = embedding_dim
        self.compute_dtype = compute_dtype
        if key is None:
            key = jax.random.PRNGKey(42)
        self.embedding_matrix = (
            jax.random.normal(key, (soft_unit_dim, embedding_dim), jnp.float32) * 0.1
        )

    def __call__(self, soft_units):
        return soft_unit_embedding(
            soft_units, self.embedding_matrix, compute_dtype=self.compute_dtype
        )


if __name__ == "__main__":
    key = jax.random.PRNGKey(0)
    k_x1, k_x2, k_w = jax.random.split(key, 3)

    # --- Case 1: module defaults (soft_unit_dim=1000, embedding_dim=256),
    #             small batch/seq: batch=2, seq_len=8.  Exercises K=1000
    #             (not a multiple of 128) via full-dim K/N blocks, single tile.
    B1, S1, SOFT_DIM, EMB_DIM = 2, 8, 1000, 256
    logits1 = jax.random.normal(k_x1, (B1, S1, SOFT_DIM), jnp.float32)
    soft_units1 = jax.nn.softmax(logits1, axis=-1)

    module = SoftUnitEmbeddingPallas(SOFT_DIM, EMB_DIM, key=k_w)

    out1 = module(soft_units1)
    out1 = jax.block_until_ready(out1)
    ref1 = jnp.matmul(soft_units1, module.embedding_matrix)
    assert out1.shape == (B1, S1, EMB_DIM)
    assert jnp.allclose(out1, ref1, atol=2e-5, rtol=1e-4), "mismatch vs reference (case 1)"

    # --- Case 2: longer sequence so M = B*S = 600 is not a multiple of tm=512;
    #             exercises the tiled path with zero-row padding + output slice.
    B2, S2 = 2, 300
    logits2 = jax.random.normal(k_x2, (B2, S2, SOFT_DIM), jnp.float32)
    soft_units2 = jax.nn.softmax(logits2, axis=-1)

    out2 = module(soft_units2)
    out2 = jax.block_until_ready(out2)
    ref2 = jnp.matmul(soft_units2, module.embedding_matrix)
    assert out2.shape == (B2, S2, EMB_DIM)
    assert jnp.allclose(out2, ref2, atol=2e-5, rtol=1e-4), "mismatch vs reference (case 2)"

    print("KERNEL_OK")
</pallas_src>

<mosaic_0001>
module attributes {stable_mosaic.version = 11 : i64} {
  func.func @_soft_unit_embed_kernel(%arg0: i32, %arg1: memref<16x1000xf32, #tpu.memory_space<vmem>>, %arg2: memref<1000x256xf32, #tpu.memory_space<vmem>>, %arg3: memref<16x256xf32, #tpu.memory_space<vmem>>) attributes {dimension_semantics = [#tpu.dimension_semantics<parallel>], iteration_bounds = array<i64: 1>, scalar_prefetch = 0 : i64, scratch_operands = 0 : i64, tpu.core_type = #tpu.core_type<tc>, window_params = [{transform_indices = @transform_0, window_bounds = array<i64: 16, 1000>}, {pipeline_mode = #tpu.pipeline_mode<synchronous>, transform_indices = @transform_1, window_bounds = array<i64: 1000, 256>}, {transform_indices = @transform_2, window_bounds = array<i64: 16, 256>}]} {
    %c0 = arith.constant 0 : index
    %c0_0 = arith.constant 0 : index
    %0 = vector.load %arg1[%c0, %c0_0] : memref<16x1000xf32, #tpu.memory_space<vmem>>, vector<16x1000xf32>
    %c0_1 = arith.constant 0 : index
    %c0_2 = arith.constant 0 : index
    %1 = vector.load %arg2[%c0_1, %c0_2] : memref<1000x256xf32, #tpu.memory_space<vmem>>, vector<1000x256xf32>
    %cst = arith.constant dense<0.000000e+00> : vector<16x256xf32>
    %2 = tpu.matmul %0, %1, %cst {dimension_numbers = #tpu.dot_dimension_numbers<[1], [0], [0], [1], [0, 0, 1, 1], [], []>} : vector<16x1000xf32>, vector<1000x256xf32>, vector<16x256xf32> -> vector<16x256xf32>
    %c0_3 = arith.constant 0 : index
    %c0_4 = arith.constant 0 : index
    %3 = vector.load %arg3[%c0_3, %c0_4] : memref<16x256xf32, #tpu.memory_space<vmem>>, vector<16x256xf32>
    tpu.vector_store %arg3[%c0_3, %c0_4], %2 {strides = array<i32>} : memref<16x256xf32, #tpu.memory_space<vmem>>, vector<16x256xf32>,
    return
  }
  func.func @transform_0(%arg0: i32) -> (i32, i32) {
    %c0_i32 = arith.constant 0 : i32
    %c0_i32_0 = arith.constant 0 : i32
    return %arg0, %c0_i32 : i32, i32
  }
  func.func @transform_1(%arg0: i32) -> (i32, i32) {
    %c0_i32 = arith.constant 0 : i32
    %c0_i32_0 = arith.constant 0 : i32
    %c0_i32_1 = arith.constant 0 : i32
    return %c0_i32, %c0_i32_0 : i32, i32
  }
  func.func @transform_2(%arg0: i32) -> (i32, i32) {
    %c0_i32 = arith.constant 0 : i32
    %c0_i32_0 = arith.constant 0 : i32
    return %arg0, %c0_i32 : i32, i32
  }
}

</mosaic_0001>

<llo_original>
// kernel: tpu_custom_call.1
$region0: #{tpu_custom_call.1}
  #allocation0 [shape = 'u32[]', space=smem, size = 0x4, offset = 0x4, fixed_abs, tag = 'smem constant byte address 0x4 - core index']
  #allocation1 [shape = 'u32[144,128]{1,0:T(1,128)}', space=vmem, size = 0x12000, scoped, tag = 'internal scratch']
  %s0 = inlined_call_operand.hbm [shape: f32[16,1000], index: 0, kind: input, shape index: {}]
  %s1 = inlined_call_operand.hbm [shape: f32[1000,256], index: 1, kind: input, shape index: {}]
  %s2 = inlined_call_operand.hbm [shape: f32[16,256], index: 2, kind: output, shape index: {}]
  %s3 = sld [smem:[#allocation0]]
  $region26: #{tpu_custom_call.1} parent=0
    _
  %s5 = ssub.s32 1, %s3
  %s6 = scalar_select 0, %s5, %s3
  $region1: #{tpu_custom_call.1} parent=0
    #allocation2 [shape = 'u8[65536]{0}', space=vmem, size = 0x10000, scoped, tag = 'input window, operand 0, single buffered']
    #allocation3 [shape = 's32[1]{0}', space=sflag, size = 0x4, scoped, tag = 'scoped memory for tpu_custom_call.1']
    #allocation4 [shape = 's32[1]{0}', space=sflag, size = 0x4, scoped, tag = 'scoped memory for tpu_custom_call.1']
    #allocation5 [shape = 'u8[1024000]{0}', space=vmem, size = 0xfa000, scoped, tag = 'input window, operand 1, single buffered']
    #allocation6 [shape = 's32[1]{0}', space=sflag, size = 0x4, scoped, tag = 'scoped memory for tpu_custom_call.1']
    #allocation7 [shape = 'u8[16384]{0}', space=vmem, size = 0x4000, scoped, tag = 'output window, operand 0, single buffered']
    %7 = vsyncpa [#allocation3], 0
    %8 = vsyncpa [#allocation6], 0
    %9 = vsyncpa [#allocation4], 0
    // Predicated region
    $region2: #{tpu_custom_call.1} parent=1 // pred_check
      _
    $region3: #{tpu_custom_call.1} parent=1 // pred_check_branch
      %11 = sbr.rel (0) target = $region5
    $region4: #{tpu_custom_call.1} parent=1 // pred_region
      %s13 = ssub.s32 2048, 2048
      %14 = vsyncadd [#allocation3], %s13
      %s15 = sshll.u32 [#allocation2], 4
      %s16 = int_to_ptr.vmem [resolvable:$true] %s15
      %21 = dma.hbm_to_vmem [thread:$0]  %s0, 2048, %s16, [#allocation3], 1024, 1024, 64
    $region5: #{tpu_custom_call.1} parent=1 // pred_fallthru
      _
    // Predicated region
    $region6: #{tpu_custom_call.1} parent=1 // pred_check
      _
    $region7: #{tpu_custom_call.1} parent=1 // pred_check_branch
      %23 = sbr.rel (0) target = $region9
    $region8: #{tpu_custom_call.1} parent=1 // pred_region
      %s25 = ssub.s32 32000, 32000
      %26 = vsyncadd [#allocation6], %s25
      %s27 = sshll.u32 [#allocation5], 4
      %s28 = int_to_ptr.vmem [resolvable:$true] %s27
      %33 = dma.hbm_to_vmem [thread:$0]  %s1, 32000, %s28, [#allocation6], 256, 256, 16
    $region9: #{tpu_custom_call.1} parent=1 // pred_fallthru
      _
    // Predicated region
    $region10: #{tpu_custom_call.1} parent=1 // pred_check
      _
    $region11: #{tpu_custom_call.1} parent=1 // pred_check_branch
      %35 = sbr.rel (0) target = $region13
    $region12: #{tpu_custom_call.1} parent=1 // pred_region
      %36 = dma.done [#allocation3], 2048
    $region13: #{tpu_custom_call.1} parent=1 // pred_fallthru
      _
    // Predicated region
    $region14: #{tpu_custom_call.1} parent=1 // pred_check
      _
    $region15: #{tpu_custom_call.1} parent=1 // pred_check_branch
      %38 = sbr.rel (0) target = $region17
    $region16: #{tpu_custom_call.1} parent=1 // pred_region
      %39 = dma.done [#allocation6], 32000
    $region17: #{tpu_custom_call.1} parent=1 // pred_fallthru
      _
    %v40 = vld [vmem:[#allocation2] sm:$0xff]
    %v41 = vld [vmem:[#allocation2 + $0x8] sm:$0xff]
    %v42 = vld [vmem:[#allocation2 + $0x10] sm:$0xff]
    %v43 = vld [vmem:[#allocation2 + $0x18] sm:$0xff]
    %v44 = vld [vmem:[#allocation2 + $0x20] sm:$0xff]
    %v45 = vld [vmem:[#allocation2 + $0x28] sm:$0xff]
    %v46 = vld [vmem:[#allocation2 + $0x30] sm:$0xff]
    %v47 = vld [vmem:[#allocation2 + $0x38] sm:$0xff]
    %v48 = vld [vmem:[#allocation2 + $0x40] sm:$0xff]
    %v49 = vld [vmem:[#allocation2 + $0x48] sm:$0xff]
    %v50 = vld [vmem:[#allocation2 + $0x50] sm:$0xff]
    %v51 = vld [vmem:[#allocation2 + $0x58] sm:$0xff]
    %v52 = vld [vmem:[#allocation2 + $0x60] sm:$0xff]
    %v53 = vld [vmem:[#allocation2 + $0x68] sm:$0xff]
    %v54 = vld [vmem:[#allocation2 + $0x70] sm:$0xff]
    %v55 = vld [vmem:[#allocation2 + $0x78] sm:$0xff]
    %v56 = vld [vmem:[#allocation5] sm:$0xff]
    %v57 = vld [vmem:[#allocation5 + $0x8] sm:$0xff]
    %v58 = vld [vmem:[#allocation5 + $0x10] sm:$0xff]
    %v59 = vld [vmem:[#allocation5 + $0x18] sm:$0xff]
    %v60 = vld [vmem:[#allocation5 + $0x20] sm:$0xff]
    %v61 = vld [vmem:[#allocation5 + $0x28] sm:$0xff]
    %v62 = vld [vmem:[#allocation5 + $0x30] sm:$0xff]
    %v63 = vld [vmem:[#allocation5 + $0x38] sm:$0xff]
    %v64 = vld [vmem:[#allocation5 + $0x40] sm:$0xff]
    %v65 = vld [vmem:[#allocation5 + $0x48] sm:$0xff]
    %v66 = vld [vmem:[#allocation5 + $0x50] sm:$0xff]
    %v67 = vld [vmem:[#allocation5 + $0x58] sm:$0xff]
    %v68 = vld [vmem:[#allocation5 + $0x60] sm:$0xff]
    %v69 = vld [vmem:[#allocation5 + $0x68] sm:$0xff]
    %v70 = vld [vmem:[#allocation5 + $0x70] sm:$0xff]
    %v71 = vld [vmem:[#allocation5 + $0x78] sm:$0xff]
    %v72 = vld [vmem:[#allocation5 + $0x80] sm:$0xff]
    %v73 = vld [vmem:[#allocation5 + $0x88] sm:$0xff]
    %v74 = vld [vmem:[#allocation5 + $0x90] sm:$0xff]
    %v75 = vld [vmem:[#allocation5 + $0x98] sm:$0xff]
    %v76 = vld [vmem:[#allocation5 + $0xa0] sm:$0xff]
    %v77 = vld [vmem:[#allocation5 + $0xa8] sm:$0xff]
    %v78 = vld [vmem:[#allocation5 + $0xb0] sm:$0xff]
    %v79 = vld [vmem:[#allocation5 + $0xb8] sm:$0xff]
    %v80 = vld [vmem:[#allocation5 + $0xc0] sm:$0xff]
    %v81 = vld [vmem:[#allocation5 + $0xc8] sm:$0xff]
    %v82 = vld [vmem:[#allocation5 + $0xd0] sm:$0xff]
    %v83 = vld [vmem:[#allocation5 + $0xd8] sm:$0xff]
    %v84 = vld [vmem:[#allocation5 + $0xe0] sm:$0xff]
    %v85 = vld [vmem:[#allocation5 + $0xe8] sm:$0xff]
    %v86 = vld [vmem:[#allocation5 + $0xf0] sm:$0xff]
    %v87 = vld [vmem:[#allocation5 + $0xf8] sm:$0xff]
    %v88 = vld [vmem:[#allocation5 + $0x100] sm:$0xff]
    %v89 = vld [vmem:[#allocation5 + $0x108] sm:$0xff]
    %v90 = vld [vmem:[#allocation5 + $0x110] sm:$0xff]
    %v91 = vld [vmem:[#allocation5 + $0x118] sm:$0xff]
    %v92 = vld [vmem:[#allocation5 + $0x120] sm:$0xff]
    %v93 = vld [vmem:[#allocation5 + $0x128] sm:$0xff]
    %v94 = vld [vmem:[#allocation5 + $0x130] sm:$0xff]
    %v95 = vld [vmem:[#allocation5 + $0x138] sm:$0xff]
    %v96 = vld [vmem:[#allocation5 + $0x140] sm:$0xff]
    %v97 = vld [vmem:[#allocation5 + $0x148] sm:$0xff]
    %v98 = vld [vmem:[#allocation5 + $0x150] sm:$0xff]
    %v99 = vld [vmem:[#allocation5 + $0x158] sm:$0xff]
    %v100 = vld [vmem:[#allocation5 + $0x160] sm:$0xff]
    %v101 = vld [vmem:[#allocation5 + $0x168] sm:$0xff]
    %v102 = vld [vmem:[#allocation5 + $0x170] sm:$0xff]
    %v103 = vld [vmem:[#allocation5 + $0x178] sm:$0xff]
    %v104 = vld [vmem:[#allocation5 + $0x180] sm:$0xff]
    %v105 = vld [vmem:[#allocation5 + $0x188] sm:$0xff]
    %v106 = vld [vmem:[#allocation5 + $0x190] sm:$0xff]
    %v107 = vld [vmem:[#allocation5 + $0x198] sm:$0xff]
    %v108 = vld [vmem:[#allocation5 + $0x1a0] sm:$0xff]
    %v109 = vld [vmem:[#allocation5 + $0x1a8] sm:$0xff]
    %v110 = vld [vmem:[#allocation5 + $0x1b0] sm:$0xff]
    %v111 = vld [vmem:[#allocation5 + $0x1b8] sm:$0xff]
    %v112 = vld [vmem:[#allocation5 + $0x1c0] sm:$0xff]
    %v113 = vld [vmem:[#allocation5 + $0x1c8] sm:$0xff]
    %v114 = vld [vmem:[#allocation5 + $0x1d0] sm:$0xff]
    %v115 = vld [vmem:[#allocation5 + $0x1d8] sm:$0xff]
    %v116 = vld [vmem:[#allocation5 + $0x1e0] sm:$0xff]
    %v117 = vld [vmem:[#allocation5 + $0x1e8] sm:$0xff]
    %v118 = vld [vmem:[#allocation5 + $0x1f0] sm:$0xff]
    %v119 = vld [vmem:[#allocation5 + $0x1f8] sm:$0xff]
    %v120 = vld [vmem:[#allocation5 + $0x200] sm:$0xff]
    %v121 = vld [vmem:[#allocation5 + $0x208] sm:$0xff]
    %v122 = vld [vmem:[#allocation5 + $0x210] sm:$0xff]
    %v123 = vld [vmem:[#allocation5 + $0x218] sm:$0xff]
    %v124 = vld [vmem:[#allocation5 + $0x220] sm:$0xff]
    %v125 = vld [vmem:[#allocation5 + $0x228] sm:$0xff]
    %v126 = vld [vmem:[#allocation5 + $0x230] sm:$0xff]
    %v127 = vld [vmem:[#allocation5 + $0x238] sm:$0xff]
    %v128 = vld [vmem:[#allocation5 + $0x240] sm:$0xff]
    %v129 = vld [vmem:[#allocation5 + $0x248] sm:$0xff]
    %v130 = vld [vmem:[#allocation5 + $0x250] sm:$0xff]
    %v131 = vld [vmem:[#allocation5 + $0x258] sm:$0xff]
    %v132 = vld [vmem:[#allocation5 + $0x260] sm:$0xff]
    %v133 = vld [vmem:[#allocation5 + $0x268] sm:$0xff]
    %v134 = vld [vmem:[#allocation5 + $0x270] sm:$0xff]
    %v135 = vld [vmem:[#allocation5 + $0x278] sm:$0xff]
    %v136 = vld [vmem:[#allocation5 + $0x280] sm:$0xff]
    %v137 = vld [vmem:[#allocation5 + $0x288] sm:$0xff]
    %v138 = vld [vmem:[#allocation5 + $0x290] sm:$0xff]
    %v139 = vld [vmem:[#allocation5 + $0x298] sm:$0xff]
    %v140 = vld [vmem:[#allocation5 + $0x2a0] sm:$0xff]
    %v141 = vld [vmem:[#allocation5 + $0x2a8] sm:$0xff]
    %v142 = vld [vmem:[#allocation5 + $0x2b0] sm:$0xff]
    %v143 = vld [vmem:[#allocation5 + $0x2b8] sm:$0xff]
    %v144 = vld [vmem:[#allocation5 + $0x2c0] sm:$0xff]
    %v145 = vld [vmem:[#allocation5 + $0x2c8] sm:$0xff]
    %v146 = vld [vmem:[#allocation5 + $0x2d0] sm:$0xff]
    %v147 = vld [vmem:[#allocation5 + $0x2d8] sm:$0xff]
    %v148 = vld [vmem:[#allocation5 + $0x2e0] sm:$0xff]
    %v149 = vld [vmem:[#allocation5 + $0x2e8] sm:$0xff]
    %v150 = vld [vmem:[#allocation5 + $0x2f0] sm:$0xff]
    %v151 = vld [vmem:[#allocation5 + $0x2f8] sm:$0xff]
    %v152 = vld [vmem:[#allocation5 + $0x300] sm:$0xff]
    %v153 = vld [vmem:[#allocation5 + $0x308] sm:$0xff]
    %v154 = vld [vmem:[#allocation5 + $0x310] sm:$0xff]
    %v155 = vld [vmem:[#allocation5 + $0x318] sm:$0xff]
    %v156 = vld [vmem:[#allocation5 + $0x320] sm:$0xff]
    %v157 = vld [vmem:[#allocation5 + $0x328] sm:$0xff]
    %v158 = vld [vmem:[#allocation5 + $0x330] sm:$0xff]
    %v159 = vld [vmem:[#allocation5 + $0x338] sm:$0xff]
    %v160 = vld [vmem:[#allocation5 + $0x340] sm:$0xff]
    %v161 = vld [vmem:[#allocation5 + $0x348] sm:$0xff]
    %v162 = vld [vmem:[#allocation5 + $0x350] sm:$0xff]
    %v163 = vld [vmem:[#allocation5 + $0x358] sm:$0xff]
    %v164 = vld [vmem:[#allocation5 + $0x360] sm:$0xff]
    %v165 = vld [vmem:[#allocation5 + $0x368] sm:$0xff]
    %v166 = vld [vmem:[#allocation5 + $0x370] sm:$0xff]
    %v167 = vld [vmem:[#allocation5 + $0x378] sm:$0xff]
    %v168 = vld [vmem:[#allocation5 + $0x380] sm:$0xff]
    %v169 = vld [vmem:[#allocation5 + $0x388] sm:$0xff]
    %v170 = vld [vmem:[#allocation5 + $0x390] sm:$0xff]
    %v171 = vld [vmem:[#allocation5 + $0x398] sm:$0xff]
    %v172 = vld [vmem:[#allocation5 + $0x3a0] sm:$0xff]
    %v173 = vld [vmem:[#allocation5 + $0x3a8] sm:$0xff]
    %v174 = vld [vmem:[#allocation5 + $0x3b0] sm:$0xff]
    %v175 = vld [vmem:[#allocation5 + $0x3b8] sm:$0xff]
    %v176 = vld [vmem:[#allocation5 + $0x3c0] sm:$0xff]
    %v177 = vld [vmem:[#allocation5 + $0x3c8] sm:$0xff]
    %v178 = vld [vmem:[#allocation5 + $0x3d0] sm:$0xff]
    %v179 = vld [vmem:[#allocation5 + $0x3d8] sm:$0xff]
    %v180 = vld [vmem:[#allocation5 + $0x3e0] sm:$0xff]
    %v181 = vld [vmem:[#allocation5 + $0x3e8] sm:$0xff]
    %v182 = vld [vmem:[#allocation5 + $0x3f0] sm:$0xff]
    %v183 = vld [vmem:[#allocation5 + $0x3f8] sm:$0xff]
    %v184 = vld [vmem:[#allocation5 + $0x400] sm:$0xff]
    %v185 = vld [vmem:[#allocation5 + $0x408] sm:$0xff]
    %v186 = vld [vmem:[#allocation5 + $0x410] sm:$0xff]
    %v187 = vld [vmem:[#allocation5 + $0x418] sm:$0xff]
    %v188 = vld [vmem:[#allocation5 + $0x420] sm:$0xff]
    %v189 = vld [vmem:[#allocation5 + $0x428] sm:$0xff]
    %v190 = vld [vmem:[#allocation5 + $0x430] sm:$0xff]
    %v191 = vld [vmem:[#allocation5 + $0x438] sm:$0xff]
    %v192 = vld [vmem:[#allocation5 + $0x440] sm:$0xff]
    %v193 = vld [vmem:[#allocation5 + $0x448] sm:$0xff]
    %v194 = vld [vmem:[#allocation5 + $0x450] sm:$0xff]
    %v195 = vld [vmem:[#allocation5 + $0x458] sm:$0xff]
    %v196 = vld [vmem:[#allocation5 + $0x460] sm:$0xff]
    %v197 = vld [vmem:[#allocation5 + $0x468] sm:$0xff]
    %v198 = vld [vmem:[#allocation5 + $0x470] sm:$0xff]
    %v199 = vld [vmem:[#allocation5 + $0x478] sm:$0xff]
    %v200 = vld [vmem:[#allocation5 + $0x480] sm:$0xff]
    %v201 = vld [vmem:[#allocation5 + $0x488] sm:$0xff]
    %v202 = vld [vmem:[#allocation5 + $0x490] sm:$0xff]
    %v203 = vld [vmem:[#allocation5 + $0x498] sm:$0xff]
    %v204 = vld [vmem:[#allocation5 + $0x4a0] sm:$0xff]
    %v205 = vld [vmem:[#allocation5 + $0x4a8] sm:$0xff]
    %v206 = vld [vmem:[#allocation5 + $0x4b0] sm:$0xff]
    %v207 = vld [vmem:[#allocation5 + $0x4b8] sm:$0xff]
    %v208 = vld [vmem:[#allocation5 + $0x4c0] sm:$0xff]
    %v209 = vld [vmem:[#allocation5 + $0x4c8] sm:$0xff]
    %v210 = vld [vmem:[#allocation5 + $0x4d0] sm:$0xff]
    %v211 = vld [vmem:[#allocation5 + $0x4d8] sm:$0xff]
    %v212 = vld [vmem:[#allocation5 + $0x4e0] sm:$0xff]
    %v213 = vld [vmem:[#allocation5 + $0x4e8] sm:$0xff]
    %v214 = vld [vmem:[#allocation5 + $0x4f0] sm:$0xff]
    %v215 = vld [vmem:[#allocation5 + $0x4f8] sm:$0xff]
    %v216 = vld [vmem:[#allocation5 + $0x500] sm:$0xff]
    %v217 = vld [vmem:[#allocation5 + $0x508] sm:$0xff]
    %v218 = vld [vmem:[#allocation5 + $0x510] sm:$0xff]
    %v219 = vld [vmem:[#allocation5 + $0x518] sm:$0xff]
    %v220 = vld [vmem:[#allocation5 + $0x520] sm:$0xff]
    %v221 = vld [vmem:[#allocation5 + $0x528] sm:$0xff]
    %v222 = vld [vmem:[#allocation5 + $0x530] sm:$0xff]
    %v223 = vld [vmem:[#allocation5 + $0x538] sm:$0xff]
    %v224 = vld [vmem:[#allocation5 + $0x540] sm:$0xff]
    %v225 = vld [vmem:[#allocation5 + $0x548] sm:$0xff]
    %v226 = vld [vmem:[#allocation5 + $0x550] sm:$0xff]
    %v227 = vld [vmem:[#allocation5 + $0x558] sm:$0xff]
    %v228 = vld [vmem:[#allocation5 + $0x560] sm:$0xff]
    %v229 = vld [vmem:[#allocation5 + $0x568] sm:$0xff]
    %v230 = vld [vmem:[#allocation5 + $0x570] sm:$0xff]
    %v231 = vld [vmem:[#allocation5 + $0x578] sm:$0xff]
    %v232 = vld [vmem:[#allocation5 + $0x580] sm:$0xff]
    %v233 = vld [vmem:[#allocation5 + $0x588] sm:$0xff]
    %v234 = vld [vmem:[#allocation5 + $0x590] sm:$0xff]
    %v235 = vld [vmem:[#allocation5 + $0x598] sm:$0xff]
    %v236 = vld [vmem:[#allocation5 + $0x5a0] sm:$0xff]
    %v237 = vld [vmem:[#allocation5 + $0x5a8] sm:$0xff]
    %v238 = vld [vmem:[#allocation5 + $0x5b0] sm:$0xff]
    %v239 = vld [vmem:[#allocation5 + $0x5b8] sm:$0xff]
    %v240 = vld [vmem:[#allocation5 + $0x5c0] sm:$0xff]
    %v241 = vld [vmem:[#allocation5 + $0x5c8] sm:$0xff]
    %v242 = vld [vmem:[#allocation5 + $0x5d0] sm:$0xff]
    %v243 = vld [vmem:[#allocation5 + $0x5d8] sm:$0xff]
    %v244 = vld [vmem:[#allocation5 + $0x5e0] sm:$0xff]
    %v245 = vld [vmem:[#allocation5 + $0x5e8] sm:$0xff]
    %v246 = vld [vmem:[#allocation5 + $0x5f0] sm:$0xff]
    %v247 = vld [vmem:[#allocation5 + $0x5f8] sm:$0xff]
    %v248 = vld [vmem:[#allocation5 + $0x600] sm:$0xff]
    %v249 = vld [vmem:[#allocation5 + $0x608] sm:$0xff]
    %v250 = vld [vmem:[#allocation5 + $0x610] sm:$0xff]
    %v251 = vld [vmem:[#allocation5 + $0x618] sm:$0xff]
    %v252 = vld [vmem:[#allocation5 + $0x620] sm:$0xff]
    %v253 = vld [vmem:[#allocation5 + $0x628] sm:$0xff]
    %v254 = vld [vmem:[#allocation5 + $0x630] sm:$0xff]
    %v255 = vld [vmem:[#allocation5 + $0x638] sm:$0xff]
    %v256 = vld [vmem:[#allocation5 + $0x640] sm:$0xff]
    %v257 = vld [vmem:[#allocation5 + $0x648] sm:$0xff]
    %v258 = vld [vmem:[#allocation5 + $0x650] sm:$0xff]
    %v259 = vld [vmem:[#allocation5 + $0x658] sm:$0xff]
    %v260 = vld [vmem:[#allocation5 + $0x660] sm:$0xff]
    %v261 = vld [vmem:[#allocation5 + $0x668] sm:$0xff]
    %v262 = vld [vmem:[#allocation5 + $0x670] sm:$0xff]
    %v263 = vld [vmem:[#allocation5 + $0x678] sm:$0xff]
    %v264 = vld [vmem:[#allocation5 + $0x680] sm:$0xff]
    %v265 = vld [vmem:[#allocation5 + $0x688] sm:$0xff]
    %v266 = vld [vmem:[#allocation5 + $0x690] sm:$0xff]
    %v267 = vld [vmem:[#allocation5 + $0x698] sm:$0xff]
    %v268 = vld [vmem:[#allocation5 + $0x6a0] sm:$0xff]
    %v269 = vld [vmem:[#allocation5 + $0x6a8] sm:$0xff]
    %v270 = vld [vmem:[#allocation5 + $0x6b0] sm:$0xff]
    %v271 = vld [vmem:[#allocation5 + $0x6b8] sm:$0xff]
    %v272 = vld [vmem:[#allocation5 + $0x6c0] sm:$0xff]
    %v273 = vld [vmem:[#allocation5 + $0x6c8] sm:$0xff]
    %v274 = vld [vmem:[#allocation5 + $0x6d0] sm:$0xff]
    %v275 = vld [vmem:[#allocation5 + $0x6d8] sm:$0xff]
    %v276 = vld [vmem:[#allocation5 + $0x6e0] sm:$0xff]
    %v277 = vld [vmem:[#allocation5 + $0x6e8] sm:$0xff]
    %v278 = vld [vmem:[#allocation5 + $0x6f0] sm:$0xff]
    %v279 = vld [vmem:[#allocation5 + $0x6f8] sm:$0xff]
    %v280 = vld [vmem:[#allocation5 + $0x700] sm:$0xff]
    %v281 = vld [vmem:[#allocation5 + $0x708] sm:$0xff]
    %v282 = vld [vmem:[#allocation5 + $0x710] sm:$0xff]
    %v283 = vld [vmem:[#allocation5 + $0x718] sm:$0xff]
    %v284 = vld [vmem:[#allocation5 + $0x720] sm:$0xff]
    %v285 = vld [vmem:[#allocation5 + $0x728] sm:$0xff]
    %v286 = vld [vmem:[#allocation5 + $0x730] sm:$0xff]
    %v287 = vld [vmem:[#allocation5 + $0x738] sm:$0xff]
    %v288 = vld [vmem:[#allocation5 + $0x740] sm:$0xff]
    %v289 = vld [vmem:[#allocation5 + $0x748] sm:$0xff]
    %v290 = vld [vmem:[#allocation5 + $0x750] sm:$0xff]
    %v291 = vld [vmem:[#allocation5 + $0x758] sm:$0xff]
    %v292 = vld [vmem:[#allocation5 + $0x760] sm:$0xff]
    %v293 = vld [vmem:[#allocation5 + $0x768] sm:$0xff]
    %v294 = vld [vmem:[#allocation5 + $0x770] sm:$0xff]
    %v295 = vld [vmem:[#allocation5 + $0x778] sm:$0xff]
    %v296 = vld [vmem:[#allocation5 + $0x780] sm:$0xff]
    %v297 = vld [vmem:[#allocation5 + $0x788] sm:$0xff]
    %v298 = vld [vmem:[#allocation5 + $0x790] sm:$0xff]
    %v299 = vld [vmem:[#allocation5 + $0x798] sm:$0xff]
    %v300 = vld [vmem:[#allocation5 + $0x7a0] sm:$0xff]
    %v301 = vld [vmem:[#allocation5 + $0x7a8] sm:$0xff]
    %v302 = vld [vmem:[#allocation5 + $0x7b0] sm:$0xff]
    %v303 = vld [vmem:[#allocation5 + $0x7b8] sm:$0xff]
    %v304 = vld [vmem:[#allocation5 + $0x7c0] sm:$0xff]
    %v305 = vld [vmem:[#allocation5 + $0x7c8] sm:$0xff]
    %vm306 = vcmask 850944
    %v308 = vsel %vm306, %v47, 0
    %v311 = vsel %vm306, %v55, 0
    %313 = vmatprep.subr.mxu0 %v57
    %314 = vmatpush1.msra.mxu0 %v56
    %315 = vmatprep.subr.mxu0 %v59
    %316 = vmatpush1.msra.mxu0 %v58
    %317 = vmatprep.subr.mxu0 %v61
    %318 = vmatpush1.msra.mxu0 %v60
    %319 = vmatprep.subr.mxu0 %v63
    %320 = vmatpush1.msra.mxu0 %v62
    %321 = vmatprep.subr.mxu0 %v65
    %322 = vmatpush1.msra.mxu0 %v64
    %323 = vmatprep.subr.mxu0 %v67
    %324 = vmatpush1.msra.mxu0 %v66
    %325 = vmatprep.subr.mxu0 %v69
    %326 = vmatpush1.msra.mxu0 %v68
    %327 = vmatprep.subr.mxu0 %v71
    %328 = vmatpush1.msra.mxu0 %v70
    %329 = vmatprep.subr.mxu0 %v73
    %330 = vmatpush1.msra.mxu0 %v72
    %331 = vmatprep.subr.mxu0 %v75
    %332 = vmatpush1.msra.mxu0 %v74
    %333 = vmatprep.subr.mxu0 %v77
    %334 = vmatpush1.msra.mxu0 %v76
    %335 = vmatprep.subr.mxu0 %v79
    %336 = vmatpush1.msra.mxu0 %v78
    %337 = vmatprep.subr.mxu0 %v81
    %338 = vmatpush1.msra.mxu0 %v80
    %339 = vmatprep.subr.mxu0 %v83
    %340 = vmatpush1.msra.mxu0 %v82
    %341 = vmatprep.subr.mxu0 %v85
    %342 = vmatpush1.msra.mxu0 %v84
    %343 = vmatprep.subr.mxu0 %v87
    %344 = vmatpush1.msra.mxu0 %v86
    %345 = vmatprep.subr.mxu0 %v89
    %346 = vmatpush1.msra.mxu0 %v88
    %347 = vmatprep.subr.mxu0 %v91
    %348 = vmatpush1.msra.mxu0 %v90
    %349 = vmatprep.subr.mxu0 %v93
    %350 = vmatpush1.msra.mxu0 %v92
    %351 = vmatprep.subr.mxu0 %v95
    %352 = vmatpush1.msra.mxu0 %v94
    %353 = vmatprep.subr.mxu0 %v97
    %354 = vmatpush1.msra.mxu0 %v96
    %355 = vmatprep.subr.mxu0 %v99
    %356 = vmatpush1.msra.mxu0 %v98
    %357 = vmatprep.subr.mxu0 %v101
    %358 = vmatpush1.msra.mxu0 %v100
    %359 = vmatprep.subr.mxu0 %v103
    %360 = vmatpush1.msra.mxu0 %v102
    %361 = vmatprep.subr.mxu0 %v105
    %362 = vmatpush1.msra.mxu0 %v104
    %363 = vmatprep.subr.mxu0 %v107
    %364 = vmatpush1.msra.mxu0 %v106
    %365 = vmatprep.subr.mxu0 %v109
    %366 = vmatpush1.msra.mxu0 %v108
    %367 = vmatprep.subr.mxu0 %v111
    %368 = vmatpush1.msra.mxu0 %v110
    %369 = vmatprep.subr.mxu0 %v113
    %370 = vmatpush1.msra.mxu0 %v112
    %371 = vmatprep.subr.mxu0 %v115
    %372 = vmatpush1.msra.mxu0 %v114
    %373 = vmatprep.subr.mxu0 %v117
    %374 = vmatpush1.msra.mxu0 %v116
    %375 = vmatprep.subr.mxu0 %v119
    %376 = vmatpush1.msra.mxu0 %v118
    %377 = vmatprep.mubr.f32.mxu0 %v41
    %378 = vmatmul.mubr.f32.gmra.mrb[0].mxu0 %v40
    %v379 = vpop.f32.mrb[0].mxu0
    %v380 = vadd.f32 0.0, %v379
    %v381 = vpop.f32.mrb[0].mxu0
    %v382 = vadd.f32 0.0, %v381
    %383 = vmatprep.mubr.f32.mxu0 %v49
    %384 = vmatmul.mubr.f32.gmra.mrb[0].mxu0 %v48
    %v385 = vpop.f32.mrb[0].mxu0
    %v386 = vadd.f32 0.0, %v385
    %v387 = vpop.f32.mrb[0].mxu0
    %v388 = vadd.f32 0.0, %v387
    %389 = vdwg.mxu0
    %390 = vmatprep.subr.mxu0 %v121
    %391 = vmatpush1.msra.mxu0 %v120
    %392 = vmatprep.subr.mxu0 %v123
    %393 = vmatpush1.msra.mxu0 %v122
    %394 = vmatprep.subr.mxu0 %v125
    %395 = vmatpush1.msra.mxu0 %v124
    %396 = vmatprep.subr.mxu0 %v127
    %397 = vmatpush1.msra.mxu0 %v126
    %398 = vmatprep.subr.mxu0 %v129
    %399 = vmatpush1.msra.mxu0 %v128
    %400 = vmatprep.subr.mxu0 %v131
    %401 = vmatpush1.msra.mxu0 %v130
    %402 = vmatprep.subr.mxu0 %v133
    %403 = vmatpush1.msra.mxu0 %v132
    %404 = vmatprep.subr.mxu0 %v135
    %405 = vmatpush1.msra.mxu0 %v134
    %406 = vmatprep.subr.mxu0 %v137
    %407 = vmatpush1.msra.mxu0 %v136
    %408 = vmatprep.subr.mxu0 %v139
    %409 = vmatpush1.msra.mxu0 %v138
    %410 = vmatprep.subr.mxu0 %v141
    %411 = vmatpush1.msra.mxu0 %v140
    %412 = vmatprep.subr.mxu0 %v143
    %413 = vmatpush1.msra.mxu0 %v142
    %414 = vmatprep.subr.mxu0 %v145
    %415 = vmatpush1.msra.mxu0 %v144
    %416 = vmatprep.subr.mxu0 %v147
    %417 = vmatpush1.msra.mxu0 %v146
    %418 = vmatprep.subr.mxu0 %v149
    %419 = vmatpush1.msra.mxu0 %v148
    %420 = vmatprep.subr.mxu0 %v151
    %421 = vmatpush1.msra.mxu0 %v150
    %422 = vmatprep.subr.mxu0 %v153
    %423 = vmatpush1.msra.mxu0 %v152
    %424 = vmatprep.subr.mxu0 %v155
    %425 = vmatpush1.msra.mxu0 %v154
    %426 = vmatprep.subr.mxu0 %v157
    %427 = vmatpush1.msra.mxu0 %v156
    %428 = vmatprep.subr.mxu0 %v159
    %429 = vmatpush1.msra.mxu0 %v158
    %430 = vmatprep.subr.mxu0 %v161
    %431 = vmatpush1.msra.mxu0 %v160
    %432 = vmatprep.subr.mxu0 %v163
    %433 = vmatpush1.msra.mxu0 %v162
    %434 = vmatprep.subr.mxu0 %v165
    %435 = vmatpush1.msra.mxu0 %v164
    %436 = vmatprep.subr.mxu0 %v167
    %437 = vmatpush1.msra.mxu0 %v166
    %438 = vmatprep.subr.mxu0 %v169
    %439 = vmatpush1.msra.mxu0 %v168
    %440 = vmatprep.subr.mxu0 %v171
    %441 = vmatpush1.msra.mxu0 %v170
    %442 = vmatprep.subr.mxu0 %v173
    %443 = vmatpush1.msra.mxu0 %v172
    %444 = vmatprep.subr.mxu0 %v175
    %445 = vmatpush1.msra.mxu0 %v174
    %446 = vmatprep.subr.mxu0 %v177
    %447 = vmatpush1.msra.mxu0 %v176
    %448 = vmatprep.subr.mxu0 %v179
    %449 = vmatpush1.msra.mxu0 %v178
    %450 = vmatprep.subr.mxu0 %v181
    %451 = vmatpush1.msra.mxu0 %v180
    %452 = vmatprep.subr.mxu0 %v183
    %453 = vmatpush1.msra.mxu0 %v182
    %454 = vmatprep.mubr.f32.mxu0 %v43
    %455 = vmatmul.mubr.f32.gmra.mrb[0].mxu0 %v42
    %v456 = vpop.f32.mrb[0].mxu0
    %v457 = vadd.f32 %v380, %v456
    %v458 = vpop.f32.mrb[0].mxu0
    %v459 = vadd.f32 %v382, %v458
    %460 = vmatprep.mubr.f32.mxu0 %v51
    %461 = vmatmul.mubr.f32.gmra.mrb[0].mxu0 %v50
    %v462 = vpop.f32.mrb[0].mxu0
    %v463 = vadd.f32 %v386, %v462
    %v464 = vpop.f32.mrb[0].mxu0
    %v465 = vadd.f32 %v388, %v464
    %466 = vdwg.mxu0
    %467 = vmatprep.subr.mxu0 %v185
    %468 = vmatpush1.msra.mxu0 %v184
    %469 = vmatprep.subr.mxu0 %v187
    %470 = vmatpush1.msra.mxu0 %v186
    %471 = vmatprep.subr.mxu0 %v189
    %472 = vmatpush1.msra.mxu0 %v188
    %473 = vmatprep.subr.mxu0 %v191
    %474 = vmatpush1.msra.mxu0 %v190
    %475 = vmatprep.subr.mxu0 %v193
    %476 = vmatpush1.msra.mxu0 %v192
    %477 = vmatprep.subr.mxu0 %v195
    %478 = vmatpush1.msra.mxu0 %v194
    %479 = vmatprep.subr.mxu0 %v197
    %480 = vmatpush1.msra.mxu0 %v196
    %481 = vmatprep.subr.mxu0 %v199
    %482 = vmatpush1.msra.mxu0 %v198
    %483 = vmatprep.subr.mxu0 %v201
    %484 = vmatpush1.msra.mxu0 %v200
    %485 = vmatprep.subr.mxu0 %v203
    %486 = vmatpush1.msra.mxu0 %v202
    %487 = vmatprep.subr.mxu0 %v205
    %488 = vmatpush1.msra.mxu0 %v204
    %489 = vmatprep.subr.mxu0 %v207
    %490 = vmatpush1.msra.mxu0 %v206
    %491 = vmatprep.subr.mxu0 %v209
    %492 = vmatpush1.msra.mxu0 %v208
    %493 = vmatprep.subr.mxu0 %v211
    %494 = vmatpush1.msra.mxu0 %v210
    %495 = vmatprep.subr.mxu0 %v213
    %496 = vmatpush1.msra.mxu0 %v212
    %497 = vmatprep.subr.mxu0 %v215
    %498 = vmatpush1.msra.mxu0 %v214
    %499 = vmatprep.subr.mxu0 %v217
    %500 = vmatpush1.msra.mxu0 %v216
    %501 = vmatprep.subr.mxu0 %v219
    %502 = vmatpush1.msra.mxu0 %v218
    %503 = vmatprep.subr.mxu0 %v221
    %504 = vmatpush1.msra.mxu0 %v220
    %505 = vmatprep.subr.mxu0 %v223
    %506 = vmatpush1.msra.mxu0 %v222
    %507 = vmatprep.subr.mxu0 %v225
    %508 = vmatpush1.msra.mxu0 %v224
    %509 = vmatprep.subr.mxu0 %v227
    %510 = vmatpush1.msra.mxu0 %v226
    %511 = vmatprep.subr.mxu0 %v229
    %512 = vmatpush1.msra.mxu0 %v228
    %513 = vmatprep.subr.mxu0 %v231
    %514 = vmatpush1.msra.mxu0 %v230
    %515 = vmatprep.subr.mxu0 %v233
    %516 = vmatpush1.msra.mxu0 %v232
    %517 = vmatprep.subr.mxu0 %v235
    %518 = vmatpush1.msra.mxu0 %v234
    %519 = vmatprep.subr.mxu0 %v237
    %520 = vmatpush1.msra.mxu0 %v236
    %521 = vmatprep.subr.mxu0 %v239
    %522 = vmatpush1.msra.mxu0 %v238
    %523 = vmatprep.subr.mxu0 %v241
    %524 = vmatpush1.msra.mxu0 %v240
    %525 = vmatprep.subr.mxu0 %v243
    %526 = vmatpush1.msra.mxu0 %v242
    %527 = vmatprep.subr.mxu0 %v245
    %528 = vmatpush1.msra.mxu0 %v244
    %529 = vmatprep.subr.mxu0 %v247
    %530 = vmatpush1.msra.mxu0 %v246
    %531 = vmatprep.mubr.f32.mxu0 %v45
    %532 = vmatmul.mubr.f32.gmra.mrb[0].mxu0 %v44
    %v533 = vpop.f32.mrb[0].mxu0
    %v534 = vadd.f32 %v457, %v533
    %v535 = vpop.f32.mrb[0].mxu0
    %v536 = vadd.f32 %v459, %v535
    %537 = vmatprep.mubr.f32.mxu0 %v53
    %538 = vmatmul.mubr.f32.gmra.mrb[0].mxu0 %v52
    %v539 = vpop.f32.mrb[0].mxu0
    %v540 = vadd.f32 %v463, %v539
    %v541 = vpop.f32.mrb[0].mxu0
    %v542 = vadd.f32 %v465, %v541
    %543 = vdwg.mxu0
    %544 = vmatprep.subr.mxu0 %v249
    %545 = vmatpush1.msra.mxu0 %v248
    %546 = vmatprep.subr.mxu0 %v251
    %547 = vmatpush1.msra.mxu0 %v250
    %548 = vmatprep.subr.mxu0 %v253
    %549 = vmatpush1.msra.mxu0 %v252
    %550 = vmatprep.subr.mxu0 %v255
    %551 = vmatpush1.msra.mxu0 %v254
    %552 = vmatprep.subr.mxu0 %v257
    %553 = vmatpush1.msra.mxu0 %v256
    %554 = vmatprep.subr.mxu0 %v259
    %555 = vmatpush1.msra.mxu0 %v258
    %556 = vmatprep.subr.mxu0 %v261
    %557 = vmatpush1.msra.mxu0 %v260
    %558 = vmatprep.subr.mxu0 %v263
    %559 = vmatpush1.msra.mxu0 %v262
    %560 = vmatprep.subr.mxu0 %v265
    %561 = vmatpush1.msra.mxu0 %v264
    %562 = vmatprep.subr.mxu0 %v267
    %563 = vmatpush1.msra.mxu0 %v266
    %564 = vmatprep.subr.mxu0 %v269
    %565 = vmatpush1.msra.mxu0 %v268
    %566 = vmatprep.subr.mxu0 %v271
    %567 = vmatpush1.msra.mxu0 %v270
    %568 = vmatprep.subr.mxu0 %v273
    %569 = vmatpush1.msra.mxu0 %v272
    %570 = vmatprep.subr.mxu0 %v275
    %571 = vmatpush1.msra.mxu0 %v274
    %572 = vmatprep.subr.mxu0 %v277
    %573 = vmatpush1.msra.mxu0 %v276
    %574 = vmatprep.subr.mxu0 %v279
    %575 = vmatpush1.msra.mxu0 %v278
    %576 = vmatprep.subr.mxu0 %v281
    %577 = vmatpush1.msra.mxu0 %v280
    %578 = vmatprep.subr.mxu0 %v283
    %579 = vmatpush1.msra.mxu0 %v282
    %580 = vmatprep.subr.mxu0 %v285
    %581 = vmatpush1.msra.mxu0 %v284
    %582 = vmatprep.subr.mxu0 %v287
    %583 = vmatpush1.msra.mxu0 %v286
    %584 = vmatprep.subr.mxu0 %v289
    %585 = vmatpush1.msra.mxu0 %v288
    %586 = vmatprep.subr.mxu0 %v291
    %587 = vmatpush1.msra.mxu0 %v290
    %588 = vmatprep.subr.mxu0 %v293
    %589 = vmatpush1.msra.mxu0 %v292
    %590 = vmatprep.subr.mxu0 %v295
    %591 = vmatpush1.msra.mxu0 %v294
    %592 = vmatprep.subr.mxu0 %v297
    %593 = vmatpush1.msra.mxu0 %v296
    %594 = vmatprep.subr.mxu0 %v299
    %595 = vmatpush1.msra.mxu0 %v298
    %596 = vmatprep.subr.mxu0 %v301
    %597 = vmatpush1.msra.mxu0 %v300
    %598 = vmatprep.subr.mxu0 %v303
    %599 = vmatpush1.msra.mxu0 %v302
    %600 = vmatprep.subr.mxu0 %v305
    %601 = vmatpush1.msra.mxu0 %v304
    %602 = vmatprep.subr.mxu0 0.0
    %603 = vmatpush1.msra.mxu0 0.0
    %604 = vmatprep.subr.mxu0 0.0
    %605 = vmatpush1.msra.mxu0 0.0
    %606 = vmatprep.subr.mxu0 0.0
    %607 = vmatpush1.msra.mxu0 0.0
    %608 = vmatprep.mubr.f32.mxu0 %v308
    %609 = vmatmul.mubr.f32.gmra.mrb[0].mxu0 %v46
    %v610 = vpop.f32.mrb[0].mxu0
    %v611 = vadd.f32 %v534, %v610
    %v612 = vpop.f32.mrb[0].mxu0
    %v613 = vadd.f32 %v536, %v612
    %614 = vmatprep.mubr.f32.mxu0 %v311
    %615 = vmatmul.mubr.f32.gmra.mrb[0].mxu0 %v54
    %v616 = vpop.f32.mrb[0].mxu0
    %v617 = vadd.f32 %v540, %v616
    %v618 = vpop.f32.mrb[0].mxu0
    %v619 = vadd.f32 %v542, %v618
    %620 = vdwg.mxu0
    %621 = vst [vmem:[#allocation7] sm:$0xff] %v611
    %622 = vst [vmem:[#allocation7 + $0x8] sm:$0xff] %v613
    %623 = vst [vmem:[#allocation7 + $0x10] sm:$0xff] %v617
    %624 = vst [vmem:[#allocation7 + $0x18] sm:$0xff] %v619
    // Predicated region
    $region18: #{tpu_custom_call.1} parent=1 // pred_check
      _
    $region19: #{tpu_custom_call.1} parent=1 // pred_check_branch
      %626 = sbr.rel (0) target = $region21
    $region20: #{tpu_custom_call.1} parent=1 // pred_region
      %s628 = ssub.s32 512, 512
      %629 = vsyncadd [#allocation4], %s628
      %s630 = sshll.u32 [#allocation7], 4
      %s631 = int_to_ptr.vmem [resolvable:$true] %s630
      %636 = dma.vmem_to_hbm [thread:$0]  %s631, 512, %s2, [#allocation4], 256, 256, 16
    $region21: #{tpu_custom_call.1} parent=1 // pred_fallthru
      _
    // Predicated region
    $region22: #{tpu_custom_call.1} parent=1 // pred_check
      _
    $region23: #{tpu_custom_call.1} parent=1 // pred_check_branch
      %638 = sbr.rel (0) target = $region25
    $region24: #{tpu_custom_call.1} parent=1 // pred_region
      %639 = dma.done [#allocation4], 512
    $region25: #{tpu_custom_call.1} parent=1 // pred_fallthru
      _
    %640 = vsyncpa [#allocation3], 1
    %641 = vsyncpa [#allocation6], 1
    %642 = vsyncpa [#allocation4], 1

</llo_original>
